<compile_context>
chip_gen: v5e
topology: v5e:2x2
jax: 0.10.0
libtpu: 0.0.40
codegen_flags: <defaults>
</compile_context>

<pallas_src>
from typing import NamedTuple

import jax
import jax.numpy as jnp
from jax.experimental import pallas as pl
from jax.experimental.pallas import tpu as pltpu


def _round_up(x: int, m: int) -> int:
    return (x + m - 1) // m * m


def _simple_nn_kernel(x_ref, w1_ref, b1_ref, w2_ref, b2_ref, o_ref):
    # fc1 + ReLU  (MXU matmul, f32 accumulate; elementwise tail on VPU)
    h = jnp.dot(x_ref[...], w1_ref[...], preferred_element_type=jnp.float32)
    h = jnp.maximum(h + b1_ref[...], 0.0)          # (TB, HID_P) + (1, HID_P)
    # fc2 + Sigmoid (sigmoid -> EUP transcendental)
    y = jnp.dot(h, w2_ref[...], preferred_element_type=jnp.float32)
    y = jax.nn.sigmoid(y + b2_ref[...])            # (TB, OUT_P) + (1, OUT_P)
    o_ref[...] = y.astype(o_ref.dtype)


class SimpleNNParams(NamedTuple):
    w1: jax.Array        # (IN,    HID_P)
    b1: jax.Array        # (1,     HID_P)
    w2: jax.Array        # (HID_P, OUT_P)
    b2: jax.Array        # (1,     OUT_P)
    out_features: int    # unpadded OUT


def prepare_params(w1, b1, w2, b2, *, lane_granule: int = 128) -> SimpleNNParams:
    """One-time parameter padding (call at init, NOT per forward pass).

    w1: (in, hidden), b1: (hidden,), w2: (hidden, out), b2: (out,).
    Only lane (last) dims are zero-padded; IN stays at its natural width.
    """
    IN, HID = w1.shape
    OUT = w2.shape[1]
    HID_P = _round_up(HID, lane_granule)
    OUT_P = _round_up(OUT, lane_granule)
    w1_p = jnp.pad(w1, ((0, 0), (0, HID_P - HID)))
    b1_p = jnp.pad(b1, (0, HID_P - HID)).reshape(1, HID_P)
    w2_p = jnp.pad(w2, ((0, HID_P - HID), (0, OUT_P - OUT)))
    b2_p = jnp.pad(b2, (0, OUT_P - OUT)).reshape(1, OUT_P)
    return SimpleNNParams(w1_p, b1_p, w2_p, b2_p, OUT)


def simple_nn_forward(x, params: SimpleNNParams, *, block_b: int = 512):
    """x: (B, in_features).  params: output of prepare_params()."""
    B, IN = x.shape
    HID_P = params.w1.shape[1]
    OUT_P = params.w2.shape[1]
    OUT = params.out_features

    # Batch tile: multiple of 8 sublanes, capped at block_b, and small enough
    # that the grid has >=2 steps whenever B > 8 so both v7x TensorCores get
    # work via the "parallel" axis.  With block_b >= 512, large batches still
    # run >=512-row tiles (v5e/v6e HBM-roofline knee).
    B8 = _round_up(B, 8)
    TB = min(block_b, max(8, _round_up(pl.cdiv(B8, 2), 8)))
    B_P = _round_up(B, TB)

    # Only batch rows ever need padding; feature dim stays at its natural width.
    x_p = x if B_P == B else jnp.pad(x, ((0, B_P - B), (0, 0)))

    itemsize = jnp.dtype(x.dtype).itemsize
    # Advisory estimate of the padded problem that actually executes.
    cost = pl.CostEstimate(
        flops=2 * B_P * (IN * HID_P + HID_P * OUT_P),
        transcendentals=B_P * OUT_P,
        bytes_accessed=(B_P * IN + IN * HID_P + HID_P
                        + HID_P * OUT_P + OUT_P + B_P * OUT_P) * itemsize,
    )

    resident = pl.Buffered(1)  # constant index_map -> one VMEM buffer is enough

    out_p = pl.pallas_call(
        _simple_nn_kernel,
        out_shape=jax.ShapeDtypeStruct((B_P, OUT_P), x.dtype),
        grid_spec=pl.GridSpec(
            grid=(B_P // TB,),
            in_specs=[
                # x: tiled over batch, natural (unpadded) feature width.
                pl.BlockSpec((TB, IN), lambda i: (i, 0)),
                # weights/biases: VMEM-resident, fetched once, single-buffered.
                pl.BlockSpec((IN, HID_P), lambda i: (0, 0), pipeline_mode=resident),
                pl.BlockSpec((1, HID_P), lambda i: (0, 0), pipeline_mode=resident),
                pl.BlockSpec((HID_P, OUT_P), lambda i: (0, 0), pipeline_mode=resident),
                pl.BlockSpec((1, OUT_P), lambda i: (0, 0), pipeline_mode=resident),
            ],
            # Lane-dense (128-wide) output store; padded cols sliced off below.
            out_specs=pl.BlockSpec((TB, OUT_P), lambda i: (i, 0)),
        ),
        compiler_params=pltpu.CompilerParams(
            dimension_semantics=("parallel",),        # batch tiles across TCs
            vmem_limit_bytes=48 * 1024 * 1024,        # headroom under v7x 64 MiB
        ),
        cost_estimate=cost,
    )(x_p, params.w1, params.b1, params.w2, params.b2)

    # Strip padded batch rows and padded output columns (sigmoid(0)=0.5 junk).
    return out_p[:B, :OUT]


if __name__ == "__main__":
    # Small shapes consistent with the module: batch=8, input=32, hidden=64, output=16
    B, IN, HID, OUT = 8, 32, 64, 16

    key = jax.random.PRNGKey(0)
    kx, kw1, kb1, kw2, kb2 = jax.random.split(key, 5)

    x = jax.random.normal(kx, (B, IN), dtype=jnp.float32)

    # Deterministic init (mimics nn.Linear uniform(-1/sqrt(fan_in), 1/sqrt(fan_in))),
    # stored directly in (in, out) layout (PyTorch weight transposed).
    lim1 = 1.0 / (IN ** 0.5)
    lim2 = 1.0 / (HID ** 0.5)
    w1 = jax.random.uniform(kw1, (IN, HID), minval=-lim1, maxval=lim1, dtype=jnp.float32)
    b1 = jax.random.uniform(kb1, (HID,), minval=-lim1, maxval=lim1, dtype=jnp.float32)
    w2 = jax.random.uniform(kw2, (HID, OUT), minval=-lim2, maxval=lim2, dtype=jnp.float32)
    b2 = jax.random.uniform(kb2, (OUT,), minval=-lim2, maxval=lim2, dtype=jnp.float32)

    # One-time parameter padding, hoisted out of the per-call forward path.
    params = prepare_params(w1, b1, w2, b2)

    fwd = jax.jit(lambda xx: simple_nn_forward(xx, params))
    out = jax.block_until_ready(fwd(x))

    # Plain-JAX reference of the same math at full f32 precision.
    hp = jax.lax.Precision.HIGHEST
    ref_h = jnp.maximum(jnp.dot(x, w1, precision=hp) + b1, 0.0)
    ref = jax.nn.sigmoid(jnp.dot(ref_h, w2, precision=hp) + b2)

    assert out.shape == (B, OUT)
    assert jnp.allclose(out, ref, atol=1e-4, rtol=1e-4), \
        float(jnp.max(jnp.abs(out - ref)))

    print("KERNEL_OK")
</pallas_src>

<mosaic_0001>
module attributes {stable_mosaic.version = 11 : i64} {
  func.func @_simple_nn_kernel(%arg0: i32, %arg1: memref<8x32xf32, #tpu.memory_space<vmem>>, %arg2: memref<32x128xf32, #tpu.memory_space<vmem>>, %arg3: memref<1x128xf32, #tpu.memory_space<vmem>>, %arg4: memref<128x128xf32, #tpu.memory_space<vmem>>, %arg5: memref<1x128xf32, #tpu.memory_space<vmem>>, %arg6: memref<8x128xf32, #tpu.memory_space<vmem>>) attributes {dimension_semantics = [#tpu.dimension_semantics<parallel>], iteration_bounds = array<i64: 1>, scalar_prefetch = 0 : i64, scratch_operands = 0 : i64, tpu.core_type = #tpu.core_type<tc>, window_params = [{transform_indices = @transform_0, window_bounds = array<i64: 8, 32>}, {pipeline_mode = #tpu.pipeline_mode<synchronous>, transform_indices = @transform_1, window_bounds = array<i64: 32, 128>}, {pipeline_mode = #tpu.pipeline_mode<synchronous>, transform_indices = @transform_2, window_bounds = array<i64: 1, 128>}, {pipeline_mode = #tpu.pipeline_mode<synchronous>, transform_indices = @transform_3, window_bounds = array<i64: 128, 128>}, {pipeline_mode = #tpu.pipeline_mode<synchronous>, transform_indices = @transform_4, window_bounds = array<i64: 1, 128>}, {transform_indices = @transform_5, window_bounds = array<i64: 8, 128>}]} {
    %c0 = arith.constant 0 : index
    %c0_0 = arith.constant 0 : index
    %0 = vector.load %arg1[%c0, %c0_0] : memref<8x32xf32, #tpu.memory_space<vmem>>, vector<8x32xf32>
    %c0_1 = arith.constant 0 : index
    %c0_2 = arith.constant 0 : index
    %1 = vector.load %arg2[%c0_1, %c0_2] : memref<32x128xf32, #tpu.memory_space<vmem>>, vector<32x128xf32>
    %cst = arith.constant dense<0.000000e+00> : vector<8x128xf32>
    %2 = tpu.matmul %0, %1, %cst {dimension_numbers = #tpu.dot_dimension_numbers<[1], [0], [0], [1], [0, 0, 1, 1], [], []>} : vector<8x32xf32>, vector<32x128xf32>, vector<8x128xf32> -> vector<8x128xf32>
    %c0_3 = arith.constant 0 : index
    %c0_4 = arith.constant 0 : index
    %3 = vector.load %arg3[%c0_3, %c0_4] : memref<1x128xf32, #tpu.memory_space<vmem>>, vector<1x128xf32>
    %4 = vector.broadcast %3 : vector<1x128xf32> to vector<8x128xf32>
    %5 = arith.addf %2, %4 : vector<8x128xf32>
    %cst_5 = arith.constant 0.000000e+00 : f32
    %6 = vector.broadcast %cst_5 : f32 to vector<8x128xf32>
    %7 = arith.maximumf %5, %6 : vector<8x128xf32>
    %c0_6 = arith.constant 0 : index
    %c0_7 = arith.constant 0 : index
    %8 = vector.load %arg4[%c0_6, %c0_7] : memref<128x128xf32, #tpu.memory_space<vmem>>, vector<128x128xf32>
    %cst_8 = arith.constant dense<0.000000e+00> : vector<8x128xf32>
    %9 = tpu.matmul %7, %8, %cst_8 {dimension_numbers = #tpu.dot_dimension_numbers<[1], [0], [0], [1], [0, 0, 1, 1], [], []>} : vector<8x128xf32>, vector<128x128xf32>, vector<8x128xf32> -> vector<8x128xf32>
    %c0_9 = arith.constant 0 : index
    %c0_10 = arith.constant 0 : index
    %10 = vector.load %arg5[%c0_9, %c0_10] : memref<1x128xf32, #tpu.memory_space<vmem>>, vector<1x128xf32>
    %11 = vector.broadcast %10 : vector<1x128xf32> to vector<8x128xf32>
    %12 = arith.addf %9, %11 : vector<8x128xf32>
    %13 = arith.negf %12 : vector<8x128xf32>
    %14 = math.exp %13 : vector<8x128xf32>
    %cst_11 = arith.constant 1.000000e+00 : f32
    %15 = vector.broadcast %cst_11 : f32 to vector<8x128xf32>
    %16 = arith.addf %15, %14 : vector<8x128xf32>
    %17 = arith.divf %15, %16 : vector<8x128xf32>
    %c0_12 = arith.constant 0 : index
    %c0_13 = arith.constant 0 : index
    %18 = vector.load %arg6[%c0_12, %c0_13] : memref<8x128xf32, #tpu.memory_space<vmem>>, vector<8x128xf32>
    tpu.vector_store %arg6[%c0_12, %c0_13], %17 {strides = array<i32>} : memref<8x128xf32, #tpu.memory_space<vmem>>, vector<8x128xf32>,
    return
  }
  func.func @transform_0(%arg0: i32) -> (i32, i32) {
    %c0_i32 = arith.constant 0 : i32
    %c0_i32_0 = arith.constant 0 : i32
    return %arg0, %c0_i32 : i32, i32
  }
  func.func @transform_1(%arg0: i32) -> (i32, i32) {
    %c0_i32 = arith.constant 0 : i32
    %c0_i32_0 = arith.constant 0 : i32
    %c0_i32_1 = arith.constant 0 : i32
    return %c0_i32, %c0_i32_0 : i32, i32
  }
  func.func @transform_2(%arg0: i32) -> (i32, i32) {
    %c0_i32 = arith.constant 0 : i32
    %c0_i32_0 = arith.constant 0 : i32
    %c0_i32_1 = arith.constant 0 : i32
    return %c0_i32, %c0_i32_0 : i32, i32
  }
  func.func @transform_3(%arg0: i32) -> (i32, i32) {
    %c0_i32 = arith.constant 0 : i32
    %c0_i32_0 = arith.constant 0 : i32
    %c0_i32_1 = arith.constant 0 : i32
    return %c0_i32, %c0_i32_0 : i32, i32
  }
  func.func @transform_4(%arg0: i32) -> (i32, i32) {
    %c0_i32 = arith.constant 0 : i32
    %c0_i32_0 = arith.constant 0 : i32
    %c0_i32_1 = arith.constant 0 : i32
    return %c0_i32, %c0_i32_0 : i32, i32
  }
  func.func @transform_5(%arg0: i32) -> (i32, i32) {
    %c0_i32 = arith.constant 0 : i32
    %c0_i32_0 = arith.constant 0 : i32
    return %arg0, %c0_i32 : i32, i32
  }
}

</mosaic_0001>

<llo_original>
// kernel: _lambda_.1
$region0: #{_lambda_.1}
  #allocation0 [shape = 'u32[]', space=smem, size = 0x4, offset = 0x4, fixed_abs, tag = 'smem constant byte address 0x4 - core index']
  #allocation1 [shape = 'u32[72,128]{1,0:T(1,128)}', space=vmem, size = 0x9000, scoped, tag = 'internal scratch']
  %s0 = inlined_call_operand.hbm [shape: f32[8,32], index: 0, kind: input, shape index: {}]
  %s1 = inlined_call_operand.hbm [shape: f32[32,128], index: 1, kind: input, shape index: {}]
  %s2 = inlined_call_operand.hbm [shape: f32[1,128], index: 2, kind: input, shape index: {}]
  %s3 = inlined_call_operand.hbm [shape: f32[128,128], index: 3, kind: input, shape index: {}]
  %s4 = inlined_call_operand.vmem [shape: f32[1,128], index: 4, kind: input, shape index: {}]
  %s5 = inlined_call_operand.hbm [shape: f32[8,128], index: 5, kind: output, shape index: {}]
  %s6 = sld [smem:[#allocation0]]
  $region46: #{_lambda_.1} parent=0
    _
  %s8 = ssub.s32 1, %s6
  %s9 = scalar_select 0, %s8, %s6
  $region1: #{_lambda_.1} parent=0
    #allocation2 [shape = 'u8[4096]{0}', space=vmem, size = 0x1000, scoped, tag = 'input window, operand 0, single buffered']
    #allocation3 [shape = 's32[1]{0}', space=sflag, size = 0x4, scoped, tag = 'scoped memory for _lambda_.1']
    #allocation4 [shape = 's32[1]{0}', space=sflag, size = 0x4, scoped, tag = 'scoped memory for _lambda_.1']
    #allocation5 [shape = 'u8[16384]{0}', space=vmem, size = 0x4000, scoped, tag = 'input window, operand 1, single buffered']
    #allocation6 [shape = 's32[1]{0}', space=sflag, size = 0x4, scoped, tag = 'scoped memory for _lambda_.1']
    #allocation7 [shape = 'u8[512]{0}', space=vmem, size = 0x400, scoped, tag = 'input window, operand 2, single buffered']
    #allocation8 [shape = 'u8[65536]{0}', space=vmem, size = 0x10000, scoped, tag = 'input window, operand 3, single buffered']
    #allocation9 [shape = 's32[1]{0}', space=sflag, size = 0x4, scoped, tag = 'scoped memory for _lambda_.1']
    #allocation10 [shape = 'u8[4096]{0}', space=vmem, size = 0x1000, scoped, tag = 'output window, operand 0, single buffered']
    %10 = vsyncpa [#allocation3], 0
    %11 = vsyncpa [#allocation6], 0
    %12 = vsyncpa [#allocation9], 0
    %13 = vsyncpa [#allocation4], 0
    // Predicated region
    $region2: #{_lambda_.1} parent=1 // pred_check
      _
    $region3: #{_lambda_.1} parent=1 // pred_check_branch
      %15 = sbr.rel (0) target = $region5
    $region4: #{_lambda_.1} parent=1 // pred_region
      %17 = vsyncadd [#allocation3], 0
      %s19 = sshll.u32 %s0, 4
      %s20 = int_to_ptr.hbm [resolvable:$true] %s19
      %s21 = sshll.u32 [#allocation2], 4
      %s22 = int_to_ptr.vmem [resolvable:$true] %s21
      %24 = dma.hbm_to_vmem [thread:$0]  %s20, 128, %s22, [#allocation3]
    $region5: #{_lambda_.1} parent=1 // pred_fallthru
      _
    // Predicated region
    $region6: #{_lambda_.1} parent=1 // pred_check
      _
    $region7: #{_lambda_.1} parent=1 // pred_check_branch
      %26 = sbr.rel (0) target = $region9
    $region8: #{_lambda_.1} parent=1 // pred_region
      %28 = vsyncadd [#allocation6], 0
      %s29 = sshll.u32 %s1, 4
      %s30 = int_to_ptr.hbm [resolvable:$true] %s29
      %s31 = sshll.u32 [#allocation5], 4
      %s32 = int_to_ptr.vmem [resolvable:$true] %s31
      %37 = dma.hbm_to_vmem [thread:$0]  %s30, 512, %s32, [#allocation6], 128, 128, 8
    $region9: #{_lambda_.1} parent=1 // pred_fallthru
      _
    // Predicated region
    $region10: #{_lambda_.1} parent=1 // pred_check
      _
    $region11: #{_lambda_.1} parent=1 // pred_check_branch
      %39 = sbr.rel (0) target = $region13
    $region12: #{_lambda_.1} parent=1 // pred_region
      %41 = vsyncadd [#allocation6], 0
      %s43 = sshll.u32 %s2, 4
      %s44 = int_to_ptr.hbm [resolvable:$true] %s43
      %s45 = sshll.u32 [#allocation7], 4
      %s46 = int_to_ptr.vmem [resolvable:$true] %s45
      %48 = dma.hbm_to_vmem [thread:$0]  %s44, 16, %s46, [#allocation6]
    $region13: #{_lambda_.1} parent=1 // pred_fallthru
      _
    // Predicated region
    $region14: #{_lambda_.1} parent=1 // pred_check
      _
    $region15: #{_lambda_.1} parent=1 // pred_check_branch
      %50 = sbr.rel (0) target = $region17
    $region16: #{_lambda_.1} parent=1 // pred_region
      %52 = vsyncadd [#allocation9], 0
      %s53 = sshll.u32 %s3, 4
      %s54 = int_to_ptr.hbm [resolvable:$true] %s53
      %s55 = sshll.u32 [#allocation8], 4
      %s56 = int_to_ptr.vmem [resolvable:$true] %s55
      %61 = dma.hbm_to_vmem [thread:$0]  %s54, 2048, %s56, [#allocation9], 128, 128, 8
    $region17: #{_lambda_.1} parent=1 // pred_fallthru
      _
    // Predicated region
    $region18: #{_lambda_.1} parent=1 // pred_check
      _
    $region19: #{_lambda_.1} parent=1 // pred_check_branch
      %63 = sbr.rel (0) target = $region21
    $region20: #{_lambda_.1} parent=1 // pred_region
      _
    $region21: #{_lambda_.1} parent=1 // pred_fallthru
      _
    // Predicated region
    $region22: #{_lambda_.1} parent=1 // pred_check
      _
    $region23: #{_lambda_.1} parent=1 // pred_check_branch
      %65 = sbr.rel (0) target = $region25
    $region24: #{_lambda_.1} parent=1 // pred_region
      %67 = dma.done [#allocation3], 128
    $region25: #{_lambda_.1} parent=1 // pred_fallthru
      _
    // Predicated region
    $region26: #{_lambda_.1} parent=1 // pred_check
      _
    $region27: #{_lambda_.1} parent=1 // pred_check_branch
      %69 = sbr.rel (0) target = $region29
    $region28: #{_lambda_.1} parent=1 // pred_region
      %71 = dma.done [#allocation6], 512
    $region29: #{_lambda_.1} parent=1 // pred_fallthru
      _
    // Predicated region
    $region30: #{_lambda_.1} parent=1 // pred_check
      _
    $region31: #{_lambda_.1} parent=1 // pred_check_branch
      %73 = sbr.rel (0) target = $region33
    $region32: #{_lambda_.1} parent=1 // pred_region
      %75 = dma.done [#allocation6], 16
    $region33: #{_lambda_.1} parent=1 // pred_fallthru
      _
    // Predicated region
    $region34: #{_lambda_.1} parent=1 // pred_check
      _
    $region35: #{_lambda_.1} parent=1 // pred_check_branch
      %77 = sbr.rel (0) target = $region37
    $region36: #{_lambda_.1} parent=1 // pred_region
      %79 = dma.done [#allocation9], 2048
    $region37: #{_lambda_.1} parent=1 // pred_fallthru
      _
    %v80 = vld [vmem:[#allocation2] sm:$0xff]
    %v81 = vld [vmem:[#allocation5] sm:$0xff]
    %v82 = vld [vmem:[#allocation5 + $0x8] sm:$0xff]
    %v83 = vld [vmem:[#allocation5 + $0x10] sm:$0xff]
    %v84 = vld [vmem:[#allocation5 + $0x18] sm:$0xff]
    %v85 = vld [vmem:[#allocation7] sm:$0x1]
    %v87 = vperm.slane %v85, 0
    %vm89 = vcmask 261120
    %v91 = vsel %vm89, %v80, 0
    %93 = vmatpush.msra.mxu0 0.0
    %94 = vmatpush.msra.mxu0 0.0
    %95 = vmatpush.msra.mxu0 0.0
    %96 = vmatpush.msra.mxu0 0.0
    %97 = vmatpush.msra.mxu0 0.0
    %98 = vmatpush.msra.mxu0 0.0
    %99 = vmatpush.msra.mxu0 0.0
    %100 = vmatpush.msra.mxu0 0.0
    %101 = vmatpush.msra.mxu0 0.0
    %102 = vmatpush.msra.mxu0 0.0
    %103 = vmatpush.msra.mxu0 0.0
    %104 = vmatpush.msra.mxu0 0.0
    %105 = vmatpush.msra.mxu0 %v84
    %106 = vmatpush.msra.mxu0 %v83
    %107 = vmatpush.msra.mxu0 %v82
    %108 = vmatpush.msra.mxu0 %v81
    %109 = vmatmul.f32.gmra.mxu0 %v91
    %v110 = vpop.f32.mrf.mxu0
    %v111 = vadd.f32 %v87, %v110
    %112 = vdwg.mxu0
    %v113 = vmax.f32 %v111, 0.0
    %v114 = vld [vmem:[#allocation8] sm:$0xff]
    %v115 = vld [vmem:[#allocation8 + $0x8] sm:$0xff]
    %v116 = vld [vmem:[#allocation8 + $0x10] sm:$0xff]
    %v117 = vld [vmem:[#allocation8 + $0x18] sm:$0xff]
    %v118 = vld [vmem:[#allocation8 + $0x20] sm:$0xff]
    %v119 = vld [vmem:[#allocation8 + $0x28] sm:$0xff]
    %v120 = vld [vmem:[#allocation8 + $0x30] sm:$0xff]
    %v121 = vld [vmem:[#allocation8 + $0x38] sm:$0xff]
    %v122 = vld [vmem:[#allocation8 + $0x40] sm:$0xff]
    %v123 = vld [vmem:[#allocation8 + $0x48] sm:$0xff]
    %v124 = vld [vmem:[#allocation8 + $0x50] sm:$0xff]
    %v125 = vld [vmem:[#allocation8 + $0x58] sm:$0xff]
    %v126 = vld [vmem:[#allocation8 + $0x60] sm:$0xff]
    %v127 = vld [vmem:[#allocation8 + $0x68] sm:$0xff]
    %v128 = vld [vmem:[#allocation8 + $0x70] sm:$0xff]
    %v129 = vld [vmem:[#allocation8 + $0x78] sm:$0xff]
    %v130 = vld [vmem:[%s4] sm:$0x1]
    %v132 = vperm.slane %v130, 0
    %134 = vmatpush.msra.mxu0 %v129
    %135 = vmatpush.msra.mxu0 %v128
    %136 = vmatpush.msra.mxu0 %v127
    %137 = vmatpush.msra.mxu0 %v126
    %138 = vmatpush.msra.mxu0 %v125
    %139 = vmatpush.msra.mxu0 %v124
    %140 = vmatpush.msra.mxu0 %v123
    %141 = vmatpush.msra.mxu0 %v122
    %142 = vmatpush.msra.mxu0 %v121
    %143 = vmatpush.msra.mxu0 %v120
    %144 = vmatpush.msra.mxu0 %v119
    %145 = vmatpush.msra.mxu0 %v118
    %146 = vmatpush.msra.mxu0 %v117
    %147 = vmatpush.msra.mxu0 %v116
    %148 = vmatpush.msra.mxu0 %v115
    %149 = vmatpush.msra.mxu0 %v114
    %150 = vmatmul.f32.gmra.mxu0 %v113
    %v151 = vpop.f32.mrf.mxu0
    %v152 = vadd.f32 %v132, %v151
    %153 = vdwg.mxu0
    %v154 = vxor.u32 %v152, 2147483648
    %v155 = vmul.f32 %v154, 1.442695
    %v156 = vpow.pop %v155
    %v157 = vadd.f32 %v156, 1.0
    %v158 = vrcp.pop %v157
    %v159 = vmul.f32 %v157, %v158
    %v160 = vsub.f32 1.0, %v159
    %v161 = vmul.f32 %v158, %v160
    %v162 = vadd.f32 %v158, %v161
    %vm163 = vweird.f32 %v157
    %vm164 = vweird.f32 %v158
    %vm165 = vmor %vm163, %vm164
    %v166 = vsel %vm165, %v158, %v162
    %v167 = vand.u32 2147483647, %v157
    %vm168 = vcmp.eq.f32.partialorder %v167, 8.507059e+37
    %v169 = vand.u32 %v157, 2147483648
    %v170 = vor.u32 1.1754944e-38, %v169
    %v171 = vsel %vm168, %v170, %v166
    %v172 = vmul.f32 1.0, %v171
    %173 = vst [vmem:[#allocation10] sm:$0xff] %v172
    // Predicated region
    $region38: #{_lambda_.1} parent=1 // pred_check
      _
    $region39: #{_lambda_.1} parent=1 // pred_check_branch
      %175 = sbr.rel (0) target = $region41
    $region40: #{_lambda_.1} parent=1 // pred_region
      %177 = vsyncadd [#allocation4], 0
      %s179 = sshll.u32 [#allocation10], 4
      %s180 = int_to_ptr.vmem [resolvable:$true] %s179
      %s181 = sshll.u32 %s5, 4
      %s182 = int_to_ptr.hbm [resolvable:$true] %s181
      %184 = dma.vmem_to_hbm [thread:$0]  %s180, 128, %s182, [#allocation4]
    $region41: #{_lambda_.1} parent=1 // pred_fallthru
      _
    // Predicated region
    $region42: #{_lambda_.1} parent=1 // pred_check
      _
    $region43: #{_lambda_.1} parent=1 // pred_check_branch
      %186 = sbr.rel (0) target = $region45
    $region44: #{_lambda_.1} parent=1 // pred_region
      %188 = dma.done [#allocation4], 128
    $region45: #{_lambda_.1} parent=1 // pred_fallthru
      _
    %189 = vsyncpa [#allocation3], 1
    %190 = vsyncpa [#allocation6], 1
    %191 = vsyncpa [#allocation9], 1
    %192 = vsyncpa [#allocation4], 1

</llo_original>
